<compile_context>
chip_gen: v7x
topology: tpu7x:2x2x1
jax: 0.10.0
libtpu: 0.0.40
codegen_flags: <defaults>
</compile_context>

<pallas_src>
import functools
import math

import jax
import jax.numpy as jnp
from jax import lax
from jax.experimental import pallas as pl
from jax.experimental.pallas import tpu as pltpu


def _round_up(x, m):
    return ((x + m - 1) // m) * m


# ----------------------------------------------------------------------------
# Pass 1: flash-style online-softmax attention.
# grid = (B, L-tiles, S-tiles); the S-tile axis is the reduction ("arbitrary").
# Also emits the per-row softmax stats (m, l) so the optional weights pass can
# be fully S-tiled (no full-S VMEM blocks on any generation).
# ----------------------------------------------------------------------------
def _flash_attention_kernel(q_ref, k_ref, v_ref,
                            o_ref, m_ref, l_ref,
                            q_sc, m_sc, l_sc, acc_sc,
                            *, scale, kv_len, block_s, mask_s):
    j = pl.program_id(2)

    @pl.when(j == 0)
    def _():
        # Hoist the 1/sqrt(d) scale + bf16 cast of Q out of the S loop:
        # computed once per (batch, L-tile) and reused for every S-tile.
        q_sc[...] = (q_ref[0].astype(jnp.float32) * scale).astype(jnp.bfloat16)
        m_sc[...] = jnp.full_like(m_sc, -jnp.inf)
        l_sc[...] = jnp.zeros_like(l_sc)
        acc_sc[...] = jnp.zeros_like(acc_sc)

    q = q_sc[...]                          # (bl, D)  bf16, pre-scaled
    k = k_ref[0]                           # (bs, D)  bf16
    v = v_ref[0]                           # (bs, Dv) bf16

    # Q @ K^T contracting on D directly — no transposed copy of K.
    s = lax.dot_general(q, k, (((1,), (1,)), ((), ())),
                        preferred_element_type=jnp.float32)        # (bl, bs) f32

    if mask_s:  # static flag: only emitted when S was padded to a tile multiple
        col = j * block_s + lax.broadcasted_iota(jnp.int32, s.shape, 1)
        s = jnp.where(col < kv_len, s, -jnp.inf)

    m_prev = m_sc[...]
    m_new = jnp.maximum(m_prev, jnp.max(s, axis=-1, keepdims=True))
    alpha = jnp.exp(m_prev - m_new)
    p = jnp.exp(s - m_new)                                          # (bl, bs) f32
    l_sc[...] = alpha * l_sc[...] + jnp.sum(p, axis=-1, keepdims=True)
    acc_sc[...] = alpha * acc_sc[...] + jnp.dot(
        p.astype(jnp.bfloat16), v, preferred_element_type=jnp.float32)
    m_sc[...] = m_new

    @pl.when(j == pl.num_programs(2) - 1)
    def _():
        inv_l = pl.reciprocal(l_sc[...], approx=True)
        o_ref[0] = (acc_sc[...] * inv_l).astype(o_ref.dtype)
        m_ref[0] = m_sc[...]
        l_ref[0] = l_sc[...]


# ----------------------------------------------------------------------------
# Pass 2 (optional): materialize the softmax weights, fully tiled over S.
# Writeback-bound; uses exact division so returned rows sum to 1.
# ----------------------------------------------------------------------------
def _attention_weights_kernel(q_ref, k_ref, m_ref, l_ref, a_ref, *, scale):
    q = (q_ref[0].astype(jnp.float32) * scale).astype(jnp.bfloat16)   # (bl, D)
    k = k_ref[0]                                                       # (bs, D)
    s = lax.dot_general(q, k, (((1,), (1,)), ((), ())),
                        preferred_element_type=jnp.float32)            # (bl, bs)
    p = jnp.exp(s - m_ref[0]) / l_ref[0]     # exact reciprocal (hidden by writeback)
    a_ref[0] = p.astype(a_ref.dtype)


def dot_product_attention(queries, keys, values, valid_lens=None, *,
                          block_l=256, block_s=1024,
                          return_weights=False, weights_dtype=jnp.bfloat16):
    """queries: (B, L, D), keys: (B, S, D), values: (B, S, Dv).

    Returns (B, L, Dv), or ((B, L, Dv), (B, L, S)) if return_weights=True.
    """
    del valid_lens  # unused by the reference forward (plain F.softmax)

    B, L, D = queries.shape
    S = keys.shape[1]
    Dv = values.shape[2]
    out_dtype = queries.dtype
    scale = 1.0 / math.sqrt(D)

    # Tile sizes: bl 16-aligned (bf16 sublane packing); bs 128-aligned when
    # tiled so the weights writeback stays lane-dense.
    block_l = max(16, _round_up(block_l, 16))
    block_s = max(128, _round_up(block_s, 128))
    bl = block_l if L >= block_l else _round_up(L, 16)
    if B == 1:
        # Keep >= 2 steps on the parallel (B, L-tile) axes for dual-TC chips.
        bl = min(bl, max(16, _round_up(-(-L // 2), 16)))
    bs = block_s if S >= block_s else _round_up(S, 16)

    Lp = _round_up(L, bl)
    Sp = _round_up(S, bs)

    # Stream Q/K/V as bf16 (halves the dominant K/V HBM traffic); accumulation
    # inside the kernels stays f32.
    q = queries.astype(jnp.bfloat16)
    k = keys.astype(jnp.bfloat16)
    v = values.astype(jnp.bfloat16)
    if Lp != L:
        q = jnp.pad(q, ((0, 0), (0, Lp - L), (0, 0)))
    if Sp != S:
        k = jnp.pad(k, ((0, 0), (0, Sp - S), (0, 0)))
        v = jnp.pad(v, ((0, 0), (0, Sp - S), (0, 0)))

    flash = functools.partial(_flash_attention_kernel, scale=scale, kv_len=S,
                              block_s=bs, mask_s=(Sp != S))
    # TODO(synk): on v7x, sweep pipeline_mode=pl.Buffered(3) on the K/V specs.
    out, m_stats, l_stats = pl.pallas_call(
        flash,
        out_shape=(
            jax.ShapeDtypeStruct((B, Lp, Dv), out_dtype),
            jax.ShapeDtypeStruct((B, Lp, 1), jnp.float32),
            jax.ShapeDtypeStruct((B, Lp, 1), jnp.float32),
        ),
        grid=(B, Lp // bl, Sp // bs),
        in_specs=[
            pl.BlockSpec((1, bl, D), lambda b, i, j: (b, i, 0)),
            pl.BlockSpec((1, bs, D), lambda b, i, j: (b, j, 0)),
            pl.BlockSpec((1, bs, Dv), lambda b, i, j: (b, j, 0)),
        ],
        out_specs=(
            pl.BlockSpec((1, bl, Dv), lambda b, i, j: (b, i, 0)),
            pl.BlockSpec((1, bl, 1), lambda b, i, j: (b, i, 0)),
            pl.BlockSpec((1, bl, 1), lambda b, i, j: (b, i, 0)),
        ),
        scratch_shapes=[
            pltpu.VMEM((bl, D), jnp.bfloat16),   # pre-scaled Q (hoisted)
            pltpu.VMEM((bl, 1), jnp.float32),    # running max m
            pltpu.VMEM((bl, 1), jnp.float32),    # running denom l
            pltpu.VMEM((bl, Dv), jnp.float32),   # output accumulator
        ],
        compiler_params=pltpu.CompilerParams(
            dimension_semantics=("parallel", "parallel", "arbitrary")),
    )(q, k, v)
    out = out[:, :L, :]

    if not return_weights:
        return out

    wkernel = functools.partial(_attention_weights_kernel, scale=scale)
    attn = pl.pallas_call(
        wkernel,
        out_shape=jax.ShapeDtypeStruct((B, Lp, Sp), weights_dtype),
        grid=(B, Lp // bl, Sp // bs),
        in_specs=[
            pl.BlockSpec((1, bl, D), lambda b, i, j: (b, i, 0)),
            pl.BlockSpec((1, bs, D), lambda b, i, j: (b, j, 0)),
            pl.BlockSpec((1, bl, 1), lambda b, i, j: (b, i, 0)),
            pl.BlockSpec((1, bl, 1), lambda b, i, j: (b, i, 0)),
        ],
        out_specs=pl.BlockSpec((1, bl, bs), lambda b, i, j: (b, i, j)),
        compiler_params=pltpu.CompilerParams(
            dimension_semantics=("parallel", "parallel", "parallel")),
    )(q, k, m_stats, l_stats)
    return out, attn[:, :L, :S]


if __name__ == "__main__":
    def reference(q, k, v):
        d = q.shape[-1]
        scores = jnp.einsum("bld,bsd->bls", q, k) / math.sqrt(d)
        probs = jax.nn.softmax(scores, axis=-1)
        return jnp.einsum("bls,bsv->blv", probs, v), probs

    # Case 1: small shapes typical of the module's usage.
    B, L, S, D, Dv = 2, 8, 8, 32, 32
    kq, kk, kv = jax.random.split(jax.random.PRNGKey(0), 3)
    queries = jax.random.normal(kq, (B, L, D), jnp.float32)
    keys = jax.random.normal(kk, (B, S, D), jnp.float32)
    values = jax.random.normal(kv, (B, S, Dv), jnp.float32)

    out = dot_product_attention(queries, keys, values)
    out_w, attn = dot_product_attention(queries, keys, values, return_weights=True)
    jax.block_until_ready((out, out_w, attn))
    ref_out, ref_probs = reference(queries, keys, values)
    assert out.shape == (B, L, Dv) and out_w.shape == (B, L, Dv)
    assert attn.shape == (B, L, S)
    # Tolerance covers bf16 MXU inputs + approx reciprocal.
    assert float(jnp.max(jnp.abs(out - ref_out))) < 5e-2
    assert float(jnp.max(jnp.abs(out_w - ref_out))) < 5e-2
    assert float(jnp.max(jnp.abs(attn.astype(jnp.float32) - ref_probs))) < 5e-2

    # Case 2: exercises multi-tile grid, S/L padding + masking and the tiled
    # weights path.
    B, L, S, D, Dv = 2, 200, 200, 64, 64
    kq, kk, kv = jax.random.split(jax.random.PRNGKey(1), 3)
    queries = jax.random.normal(kq, (B, L, D), jnp.float32)
    keys = jax.random.normal(kk, (B, S, D), jnp.float32)
    values = jax.random.normal(kv, (B, S, Dv), jnp.float32)

    out2, attn2 = dot_product_attention(queries, keys, values,
                                        block_l=128, block_s=128,
                                        return_weights=True)
    jax.block_until_ready((out2, attn2))
    ref_out2, ref_probs2 = reference(queries, keys, values)
    assert out2.shape == (B, L, Dv) and attn2.shape == (B, L, S)
    assert float(jnp.max(jnp.abs(out2 - ref_out2))) < 5e-2
    assert float(jnp.max(jnp.abs(attn2.astype(jnp.float32) - ref_probs2))) < 5e-2

    print("KERNEL_OK")
</pallas_src>

<mosaic_0001>
module attributes {stable_mosaic.version = 11 : i64} {
  func.func @_flash_attention_kernel(%arg0: i32, %arg1: i32, %arg2: i32, %arg3: memref<1x16x32xbf16, #tpu.memory_space<vmem>>, %arg4: memref<1x16x32xbf16, #tpu.memory_space<vmem>>, %arg5: memref<1x16x32xbf16, #tpu.memory_space<vmem>>, %arg6: memref<1x16x32xf32, #tpu.memory_space<vmem>>, %arg7: memref<1x16x1xf32, #tpu.memory_space<vmem>>, %arg8: memref<1x16x1xf32, #tpu.memory_space<vmem>>, %arg9: memref<16x32xbf16, #tpu.memory_space<vmem>>, %arg10: memref<16x1xf32, #tpu.memory_space<vmem>>, %arg11: memref<16x1xf32, #tpu.memory_space<vmem>>, %arg12: memref<16x32xf32, #tpu.memory_space<vmem>>) attributes {dimension_semantics = [#tpu.dimension_semantics<parallel>, #tpu.dimension_semantics<parallel>, #tpu.dimension_semantics<arbitrary>], iteration_bounds = array<i64: 2, 1, 1>, scalar_prefetch = 0 : i64, scratch_operands = 4 : i64, tpu.core_type = #tpu.core_type<tc>, window_params = [{transform_indices = @transform_0, window_bounds = array<i64: 1, 16, 32>}, {transform_indices = @transform_1, window_bounds = array<i64: 1, 16, 32>}, {transform_indices = @transform_2, window_bounds = array<i64: 1, 16, 32>}, {transform_indices = @transform_3, window_bounds = array<i64: 1, 16, 32>}, {transform_indices = @transform_4, window_bounds = array<i64: 1, 16, 1>}, {transform_indices = @transform_5, window_bounds = array<i64: 1, 16, 1>}]} {
    %c0_i32 = arith.constant 0 : i32
    %0 = arith.cmpi eq, %arg2, %c0_i32 : i32
    %1 = arith.extui %0 : i1 to i32
    %c0_i32_0 = arith.constant 0 : i32
    %2 = arith.cmpi ne, %1, %c0_i32_0 : i32
    scf.if %2 {
      %c0_26 = arith.constant 0 : index
      %c0_27 = arith.constant 0 : index
      %c0_28 = arith.constant 0 : index
      %43 = vector.load %arg3[%c0_26, %c0_27, %c0_28] : memref<1x16x32xbf16, #tpu.memory_space<vmem>>, vector<1x16x32xbf16>
      %44 = vector.shape_cast %43 : vector<1x16x32xbf16> to vector<16x32xbf16>
      %45 = arith.extf %44 : vector<16x32xbf16> to vector<16x32xf32>
      %cst_29 = arith.constant 0.176776692 : f32
      %46 = vector.broadcast %cst_29 : f32 to vector<16x32xf32>
      %47 = arith.mulf %45, %46 : vector<16x32xf32>
      %48 = arith.truncf %47 : vector<16x32xf32> to vector<16x32xbf16>
      %c0_30 = arith.constant 0 : index
      %c0_31 = arith.constant 0 : index
      %49 = vector.load %arg9[%c0_30, %c0_31] : memref<16x32xbf16, #tpu.memory_space<vmem>>, vector<16x32xbf16>
      tpu.vector_store %arg9[%c0_30, %c0_31], %48 {strides = array<i32>} : memref<16x32xbf16, #tpu.memory_space<vmem>>, vector<16x32xbf16>,
      %cst_32 = arith.constant 0xFF800000 : f32
      %50 = vector.broadcast %cst_32 : f32 to vector<16x1xf32>
      %c0_33 = arith.constant 0 : index
      %c0_34 = arith.constant 0 : index
      %51 = vector.load %arg10[%c0_33, %c0_34] : memref<16x1xf32, #tpu.memory_space<vmem>>, vector<16x1xf32>
      tpu.vector_store %arg10[%c0_33, %c0_34], %50 {strides = array<i32>} : memref<16x1xf32, #tpu.memory_space<vmem>>, vector<16x1xf32>,
      %cst_35 = arith.constant 0.000000e+00 : f32
      %52 = vector.broadcast %cst_35 : f32 to vector<16x1xf32>
      %c0_36 = arith.constant 0 : index
      %c0_37 = arith.constant 0 : index
      %53 = vector.load %arg11[%c0_36, %c0_37] : memref<16x1xf32, #tpu.memory_space<vmem>>, vector<16x1xf32>
      tpu.vector_store %arg11[%c0_36, %c0_37], %52 {strides = array<i32>} : memref<16x1xf32, #tpu.memory_space<vmem>>, vector<16x1xf32>,
      %cst_38 = arith.constant 0.000000e+00 : f32
      %54 = vector.broadcast %cst_38 : f32 to vector<16x32xf32>
      %c0_39 = arith.constant 0 : index
      %c0_40 = arith.constant 0 : index
      %55 = vector.load %arg12[%c0_39, %c0_40] : memref<16x32xf32, #tpu.memory_space<vmem>>, vector<16x32xf32>
      tpu.vector_store %arg12[%c0_39, %c0_40], %54 {strides = array<i32>} : memref<16x32xf32, #tpu.memory_space<vmem>>, vector<16x32xf32>,
    } else {
    }
    %c0 = arith.constant 0 : index
    %c0_1 = arith.constant 0 : index
    %3 = vector.load %arg9[%c0, %c0_1] : memref<16x32xbf16, #tpu.memory_space<vmem>>, vector<16x32xbf16>
    %c0_2 = arith.constant 0 : index
    %c0_3 = arith.constant 0 : index
    %c0_4 = arith.constant 0 : index
    %4 = vector.load %arg4[%c0_2, %c0_3, %c0_4] : memref<1x16x32xbf16, #tpu.memory_space<vmem>>, vector<1x16x32xbf16>
    %5 = vector.shape_cast %4 : vector<1x16x32xbf16> to vector<16x32xbf16>
    %c0_5 = arith.constant 0 : index
    %c0_6 = arith.constant 0 : index
    %c0_7 = arith.constant 0 : index
    %6 = vector.load %arg5[%c0_5, %c0_6, %c0_7] : memref<1x16x32xbf16, #tpu.memory_space<vmem>>, vector<1x16x32xbf16>
    %7 = vector.shape_cast %6 : vector<1x16x32xbf16> to vector<16x32xbf16>
    %cst = arith.constant dense<0.000000e+00> : vector<16x16xf32>
    %8 = tpu.matmul %3, %5, %cst {dimension_numbers = #tpu.dot_dimension_numbers<[1], [1], [0], [0], [0, 0, 1, 0], [], []>} : vector<16x32xbf16>, vector<16x32xbf16>, vector<16x16xf32> -> vector<16x16xf32>
    %c16_i32 = arith.constant 16 : i32
    %9 = arith.muli %arg2, %c16_i32 : i32
    %10 = tpu.iota {dimensions = array<i32: 1>} : vector<16x16xi32>
    %11 = vector.broadcast %9 : i32 to vector<16x16xi32>
    %12 = arith.addi %11, %10 : vector<16x16xi32>
    %c8_i32 = arith.constant 8 : i32
    %13 = vector.broadcast %c8_i32 : i32 to vector<16x16xi32>
    %14 = arith.cmpi slt, %12, %13 : vector<16x16xi32>
    %cst_8 = arith.constant 0xFF800000 : f32
    %15 = vector.broadcast %cst_8 : f32 to vector<16x16xf32>
    %16 = arith.select %14, %8, %15 : vector<16x16xi1>, vector<16x16xf32>
    %c0_9 = arith.constant 0 : index
    %c0_10 = arith.constant 0 : index
    %17 = vector.load %arg10[%c0_9, %c0_10] : memref<16x1xf32, #tpu.memory_space<vmem>>, vector<16x1xf32>
    %cst_11 = arith.constant dense<0xFF800000> : vector<16xf32>
    %18 = vector.multi_reduction <maximumf>, %16, %cst_11 [1] : vector<16x16xf32> to vector<16xf32>
    %19 = vector.shape_cast %18 : vector<16xf32> to vector<16x1xf32>
    %20 = arith.maximumf %17, %19 : vector<16x1xf32>
    %21 = arith.subf %17, %20 : vector<16x1xf32>
    %22 = math.exp %21 : vector<16x1xf32>
    %23 = vector.broadcast %20 : vector<16x1xf32> to vector<16x16xf32>
    %24 = arith.subf %16, %23 : vector<16x16xf32>
    %25 = math.exp %24 : vector<16x16xf32>
    %c0_12 = arith.constant 0 : index
    %c0_13 = arith.constant 0 : index
    %26 = vector.load %arg11[%c0_12, %c0_13] : memref<16x1xf32, #tpu.memory_space<vmem>>, vector<16x1xf32>
    %27 = arith.mulf %22, %26 : vector<16x1xf32>
    %cst_14 = arith.constant dense<0.000000e+00> : vector<16xf32>
    %28 = vector.multi_reduction <add>, %25, %cst_14 [1] : vector<16x16xf32> to vector<16xf32>
    %29 = vector.shape_cast %28 : vector<16xf32> to vector<16x1xf32>
    %30 = arith.addf %27, %29 : vector<16x1xf32>
    %c0_15 = arith.constant 0 : index
    %c0_16 = arith.constant 0 : index
    %31 = vector.load %arg11[%c0_15, %c0_16] : memref<16x1xf32, #tpu.memory_space<vmem>>, vector<16x1xf32>
    tpu.vector_store %arg11[%c0_15, %c0_16], %30 {strides = array<i32>} : memref<16x1xf32, #tpu.memory_space<vmem>>, vector<16x1xf32>,
    %c0_17 = arith.constant 0 : index
    %c0_18 = arith.constant 0 : index
    %32 = vector.load %arg12[%c0_17, %c0_18] : memref<16x32xf32, #tpu.memory_space<vmem>>, vector<16x32xf32>
    %33 = vector.broadcast %22 : vector<16x1xf32> to vector<16x32xf32>
    %34 = arith.mulf %33, %32 : vector<16x32xf32>
    %35 = arith.truncf %25 : vector<16x16xf32> to vector<16x16xbf16>
    %cst_19 = arith.constant dense<0.000000e+00> : vector<16x32xf32>
    %36 = tpu.matmul %35, %7, %cst_19 {dimension_numbers = #tpu.dot_dimension_numbers<[1], [0], [0], [1], [0, 0, 1, 1], [], []>} : vector<16x16xbf16>, vector<16x32xbf16>, vector<16x32xf32> -> vector<16x32xf32>
    %37 = arith.addf %34, %36 : vector<16x32xf32>
    %c0_20 = arith.constant 0 : index
    %c0_21 = arith.constant 0 : index
    %38 = vector.load %arg12[%c0_20, %c0_21] : memref<16x32xf32, #tpu.memory_space<vmem>>, vector<16x32xf32>
    tpu.vector_store %arg12[%c0_20, %c0_21], %37 {strides = array<i32>} : memref<16x32xf32, #tpu.memory_space<vmem>>, vector<16x32xf32>,
    %c0_22 = arith.constant 0 : index
    %c0_23 = arith.constant 0 : index
    %39 = vector.load %arg10[%c0_22, %c0_23] : memref<16x1xf32, #tpu.memory_space<vmem>>, vector<16x1xf32>
    tpu.vector_store %arg10[%c0_22, %c0_23], %20 {strides = array<i32>} : memref<16x1xf32, #tpu.memory_space<vmem>>, vector<16x1xf32>,
    %c0_i32_24 = arith.constant 0 : i32
    %40 = arith.cmpi eq, %arg2, %c0_i32_24 : i32
    %41 = arith.extui %40 : i1 to i32
    %c0_i32_25 = arith.constant 0 : i32
    %42 = arith.cmpi ne, %41, %c0_i32_25 : i32
    scf.if %42 {
      %c0_26 = arith.constant 0 : index
      %c0_27 = arith.constant 0 : index
      %43 = vector.load %arg11[%c0_26, %c0_27] : memref<16x1xf32, #tpu.memory_space<vmem>>, vector<16x1xf32>
      %44 = tpu.reciprocal %43 {approx = true} : vector<16x1xf32> -> vector<16x1xf32>
      %c0_28 = arith.constant 0 : index
      %c0_29 = arith.constant 0 : index
      %45 = vector.load %arg12[%c0_28, %c0_29] : memref<16x32xf32, #tpu.memory_space<vmem>>, vector<16x32xf32>
      %46 = vector.broadcast %44 : vector<16x1xf32> to vector<16x32xf32>
      %47 = arith.mulf %45, %46 : vector<16x32xf32>
      %c0_30 = arith.constant 0 : index
      %c0_31 = arith.constant 0 : index
      %c0_32 = arith.constant 0 : index
      %48 = vector.load %arg6[%c0_30, %c0_31, %c0_32] : memref<1x16x32xf32, #tpu.memory_space<vmem>>, vector<1x16x32xf32>
      %49 = vector.shape_cast %48 : vector<1x16x32xf32> to vector<16x32xf32>
      %50 = vector.shape_cast %47 : vector<16x32xf32> to vector<1x16x32xf32>
      tpu.vector_store %arg6[%c0_30, %c0_31, %c0_32], %50 {strides = array<i32>} : memref<1x16x32xf32, #tpu.memory_space<vmem>>, vector<1x16x32xf32>,
      %c0_33 = arith.constant 0 : index
      %c0_34 = arith.constant 0 : index
      %51 = vector.load %arg10[%c0_33, %c0_34] : memref<16x1xf32, #tpu.memory_space<vmem>>, vector<16x1xf32>
      %c0_35 = arith.constant 0 : index
      %c0_36 = arith.constant 0 : index
      %c0_37 = arith.constant 0 : index
      %52 = vector.load %arg7[%c0_35, %c0_36, %c0_37] : memref<1x16x1xf32, #tpu.memory_space<vmem>>, vector<1x16x1xf32>
      %53 = vector.shape_cast %52 : vector<1x16x1xf32> to vector<16x1xf32>
      %54 = vector.shape_cast %51 : vector<16x1xf32> to vector<1x16x1xf32>
      tpu.vector_store %arg7[%c0_35, %c0_36, %c0_37], %54 {strides = array<i32>} : memref<1x16x1xf32, #tpu.memory_space<vmem>>, vector<1x16x1xf32>,
      %c0_38 = arith.constant 0 : index
      %c0_39 = arith.constant 0 : index
      %55 = vector.load %arg11[%c0_38, %c0_39] : memref<16x1xf32, #tpu.memory_space<vmem>>, vector<16x1xf32>
      %c0_40 = arith.constant 0 : index
      %c0_41 = arith.constant 0 : index
      %c0_42 = arith.constant 0 : index
      %56 = vector.load %arg8[%c0_40, %c0_41, %c0_42] : memref<1x16x1xf32, #tpu.memory_space<vmem>>, vector<1x16x1xf32>
      %57 = vector.shape_cast %56 : vector<1x16x1xf32> to vector<16x1xf32>
      %58 = vector.shape_cast %55 : vector<16x1xf32> to vector<1x16x1xf32>
      tpu.vector_store %arg8[%c0_40, %c0_41, %c0_42], %58 {strides = array<i32>} : memref<1x16x1xf32, #tpu.memory_space<vmem>>, vector<1x16x1xf32>,
    } else {
    }
    return
  }
  func.func @transform_0(%arg0: i32, %arg1: i32, %arg2: i32) -> (i32, i32, i32) {
    %c0_i32 = arith.constant 0 : i32
    %c0_i32_0 = arith.constant 0 : i32
    return %arg0, %arg1, %c0_i32 : i32, i32, i32
  }
  func.func @transform_1(%arg0: i32, %arg1: i32, %arg2: i32) -> (i32, i32, i32) {
    %c0_i32 = arith.constant 0 : i32
    %c0_i32_0 = arith.constant 0 : i32
    return %arg0, %arg2, %c0_i32 : i32, i32, i32
  }
  func.func @transform_2(%arg0: i32, %arg1: i32, %arg2: i32) -> (i32, i32, i32) {
    %c0_i32 = arith.constant 0 : i32
    %c0_i32_0 = arith.constant 0 : i32
    return %arg0, %arg2, %c0_i32 : i32, i32, i32
  }
  func.func @transform_3(%arg0: i32, %arg1: i32, %arg2: i32) -> (i32, i32, i32) {
    %c0_i32 = arith.constant 0 : i32
    %c0_i32_0 = arith.constant 0 : i32
    return %arg0, %arg1, %c0_i32 : i32, i32, i32
  }
  func.func @transform_4(%arg0: i32, %arg1: i32, %arg2: i32) -> (i32, i32, i32) {
    %c0_i32 = arith.constant 0 : i32
    %c0_i32_0 = arith.constant 0 : i32
    return %arg0, %arg1, %c0_i32 : i32, i32, i32
  }
  func.func @transform_5(%arg0: i32, %arg1: i32, %arg2: i32) -> (i32, i32, i32) {
    %c0_i32 = arith.constant 0 : i32
    %c0_i32_0 = arith.constant 0 : i32
    return %arg0, %arg1, %c0_i32 : i32, i32, i32
  }
}

</mosaic_0001>

<llo_original>
// kernel: tpu_custom_call.1
$region0: #{tpu_custom_call.1}
  #allocation0 [shape = 'u32[]', space=smem, size = 0x4, offset = 0x4, fixed_abs, tag = 'smem constant byte address 0x4 - core index']
  #allocation1 [shape = 'u32[144,128]{1,0:T(1,128)}', space=vmem, size = 0x12000, scoped, tag = 'internal scratch']
  #allocation2 [shape = 'bf16[16,32]{1,0:T(16,128)(2,1)}', space=vmem, size = 0x1000, scoped, tag = 'scratch operand']
  #allocation3 [shape = 'f32[16,1]{1,0:T(8,128)}', space=vmem, size = 0x2000, scoped, tag = 'scratch operand']
  #allocation4 [shape = 'f32[16,1]{1,0:T(8,128)}', space=vmem, size = 0x2000, scoped, tag = 'scratch operand']
  #allocation5 [shape = 'f32[16,32]{1,0:T(8,128)}', space=vmem, size = 0x2000, scoped, tag = 'scratch operand']
  %s0 = inlined_call_operand.hbm [shape: bf16[2,16,32], index: 0, kind: input, shape index: {}]
  %s1 = inlined_call_operand.hbm [shape: bf16[2,16,32], index: 1, kind: input, shape index: {}]
  %s2 = inlined_call_operand.hbm [shape: bf16[2,16,32], index: 2, kind: input, shape index: {}]
  %s3 = inlined_call_operand.hbm [shape: f32[2,16,32], index: 3, kind: output, shape index: {0}]
  %s4 = inlined_call_operand.vmem [shape: f32[2,16,1], index: 4, kind: output, shape index: {1}]
  %s5 = inlined_call_operand.vmem [shape: f32[2,16,1], index: 5, kind: output, shape index: {2}]
  %6 = xla_tuple %s3, %s4, %s5
  %s7 = sld [smem:[#allocation0]]
  $region81: #{tpu_custom_call.1} parent=0
    _
  %s9 = ssub.s32 1, %s7
  %s10 = scalar_select 0, %s9, %s7
  $region1: #{tpu_custom_call.1} parent=0
    #allocation6 [shape = 'u8[8192]{0}', space=vmem, size = 0x2000, scoped, tag = 'input window, operand 0']
    #allocation7 [shape = 's32[2]{0}', space=sflag, size = 0x8, scoped, tag = 'scoped memory for tpu_custom_call.1']
    #allocation8 [shape = 's32[2]{0}', space=sflag, size = 0x8, scoped, tag = 'scoped memory for tpu_custom_call.1']
    #allocation9 [shape = 'u8[8192]{0}', space=vmem, size = 0x2000, scoped, tag = 'input window, operand 1']
    #allocation10 [shape = 's32[2]{0}', space=sflag, size = 0x8, scoped, tag = 'scoped memory for tpu_custom_call.1']
    #allocation11 [shape = 'u8[8192]{0}', space=vmem, size = 0x2000, scoped, tag = 'input window, operand 2']
    #allocation12 [shape = 'u8[16384]{0}', space=vmem, size = 0x4000, scoped, tag = 'output window, operand 0']
    %11 = vsyncpa [#allocation7], 0
    %s12 = scalar_lea.sflag [#allocation7], 1
    %13 = vsyncpa %s12, 0
    %14 = vsyncpa [#allocation10], 0
    %s15 = scalar_lea.sflag [#allocation10], 1
    %16 = vsyncpa %s15, 0
    %17 = vsyncpa [#allocation8], 0
    %s18 = scalar_lea.sflag [#allocation8], 1
    %19 = vsyncpa %s18, 0
    loop: start=0, step=1, limit=4
    $region2: #{tpu_custom_call.1} parent=1 // loop_pre_header
      _
    $region3: #{tpu_custom_call.1} parent=1 // loop_header
      %s21 = sphi 0, %s25
      %p22 = scmp.ge.s32.totalorder %s21, 4
      %s28 = sphi 0, %s47
      %s29 = sphi 0, %s43
      %s30 = sphi 0, %s39
      %s31 = sphi 0, %s28
      %s32 = sphi 0, %s29
      %s33 = sphi 0, %s30
      %s34 = sphi 0, %s31
      %s35 = sphi 0, %s32
      %s36 = sphi 0, %s33
      %s52 = sphi 0, %s54
      %s55 = sphi 0, %s52
      %s56 = sphi 0, %s55
      %s72 = sphi 0, %s56
      %s80 = sphi 0, %s82
      %s83 = sphi 0, %s80
      %s84 = sphi 0, %s83
      %s100 = sphi 0, %s84
      %s108 = sphi 0, %s110
      %s111 = sphi 0, %s108
      %s112 = sphi 0, %s111
      %s128 = sphi 0, %s112
      %s136 = sphi 0, %s138
      %s139 = sphi 0, %s136
      %s140 = sphi 0, %s139
      %s156 = sphi 0, %s140
      %s164 = sphi 0, %s166
      %s167 = sphi 0, %s164
      %s168 = sphi 0, %s167
      %s184 = sphi 0, %s168
      %s192 = sphi 0, %s194
      %s195 = sphi 0, %s192
      %s196 = sphi 0, %s195
      %s212 = sphi 0, %s196
    $region4: #{tpu_custom_call.1} parent=1 // loop_header_branch
      %24 = sbr.rel (%p22) target = $region8
    $region5: #{tpu_custom_call.1} parent=1 // loop_body
      %s26 = ssub.s32 %s21, 1
      %s27 = ssub.s32 %s21, 2
      %s37 = sadd.s32 1, %s30
      %p38 = scmp.ge.s32.totalorder %s37, 1
      %s39 = scalar_select %p38, 0, %s37
      %s40 = sadd.s32 1, %s29
      %s41 = scalar_select %p38, %s40, %s29
      %p42 = scmp.ge.s32.totalorder %s41, 1
      %s43 = scalar_select %p42, 0, %s41
      %s44 = sadd.s32 1, %s28
      %s45 = scalar_select %p42, %s44, %s28
      %p46 = scmp.ge.s32.totalorder %s45, 2
      %s47 = scalar_select %p46, 0, %s45
      %s48 = ssub.s32 %s28, %s47
      %s49 = ssub.s32 %s29, %s43
      %s50 = sor.u32 %s48, %s49
      %p51 = scmp.eq.s32.totalorder %s50, 0
      %s53 = sadd.s32 %s52, 1
      %s54 = scalar_select %p51, %s52, %s53
      %p57 = pneg %p51
      %p58 = scmp.eq.s32.totalorder %s21, 1
      %p59 = por %p57, %p58
      %p60 = scmp.ne.s32.totalorder %s52, %s55
      %p61 = scmp.eq.s32.totalorder %s21, 0
      %p62 = por %p60, %p61
      %p63 = scmp.ne.s32.totalorder %s52, %s55
      %p64 = scmp.eq.s32.totalorder %s26, 1
      %p65 = por %p63, %p64
      %p66 = scmp.ne.s32.totalorder %s55, %s56
      %p67 = scmp.eq.s32.totalorder %s26, 0
      %p68 = por %p66, %p67
      %p69 = scmp.ne.s32.totalorder %s55, %s56
      %p70 = scmp.eq.s32.totalorder %s27, 1
      %p71 = por %p69, %p70
      %p73 = scmp.ne.s32.totalorder %s56, %s72
      %p74 = scmp.eq.s32.totalorder %s27, 0
      %p75 = por %p73, %p74
      %s76 = ssub.s32 %s28, %s47
      %s77 = ssub.s32 %s30, %s39
      %s78 = sor.u32 %s76, %s77
      %p79 = scmp.eq.s32.totalorder %s78, 0
      %s81 = sadd.s32 %s80, 1
      %s82 = scalar_select %p79, %s80, %s81
      %p85 = pneg %p79
      %p86 = scmp.eq.s32.totalorder %s21, 1
      %p87 = por %p85, %p86
      %p88 = scmp.ne.s32.totalorder %s80, %s83
      %p89 = scmp.eq.s32.totalorder %s21, 0
      %p90 = por %p88, %p89
      %p91 = scmp.ne.s32.totalorder %s80, %s83
      %p92 = scmp.eq.s32.totalorder %s26, 1
      %p93 = por %p91, %p92
      %p94 = scmp.ne.s32.totalorder %s83, %s84
      %p95 = scmp.eq.s32.totalorder %s26, 0
      %p96 = por %p94, %p95
      %p97 = scmp.ne.s32.totalorder %s83, %s84
      %p98 = scmp.eq.s32.totalorder %s27, 1
      %p99 = por %p97, %p98
      %p101 = scmp.ne.s32.totalorder %s84, %s100
      %p102 = scmp.eq.s32.totalorder %s27, 0
      %p103 = por %p101, %p102
      %s104 = ssub.s32 %s28, %s47
      %s105 = ssub.s32 %s30, %s39
      %s106 = sor.u32 %s104, %s105
      %p107 = scmp.eq.s32.totalorder %s106, 0
      %s109 = sadd.s32 %s108, 1
      %s110 = scalar_select %p107, %s108, %s109
      %p113 = pneg %p107
      %p114 = scmp.eq.s32.totalorder %s21, 1
      %p115 = por %p113, %p114
      %p116 = scmp.ne.s32.totalorder %s108, %s111
      %p117 = scmp.eq.s32.totalorder %s21, 0
      %p118 = por %p116, %p117
      %p119 = scmp.ne.s32.totalorder %s108, %s111
      %p120 = scmp.eq.s32.totalorder %s26, 1
      %p121 = por %p119, %p120
      %p122 = scmp.ne.s32.totalorder %s111, %s112
      %p123 = scmp.eq.s32.totalorder %s26, 0
      %p124 = por %p122, %p123
      %p125 = scmp.ne.s32.totalorder %s111, %s112
      %p126 = scmp.eq.s32.totalorder %s27, 1
      %p127 = por %p125, %p126
      %p129 = scmp.ne.s32.totalorder %s112, %s128
      %p130 = scmp.eq.s32.totalorder %s27, 0
      %p131 = por %p129, %p130
      %s132 = ssub.s32 %s28, %s47
      %s133 = ssub.s32 %s29, %s43
      %s134 = sor.u32 %s132, %s133
      %p135 = scmp.eq.s32.totalorder %s134, 0
      %s137 = sadd.s32 %s136, 1
      %s138 = scalar_select %p135, %s136, %s137
      %p141 = pneg %p135
      %p142 = scmp.eq.s32.totalorder %s21, 1
      %p143 = por %p141, %p142
      %p144 = scmp.ne.s32.totalorder %s136, %s139
      %p145 = scmp.eq.s32.totalorder %s21, 0
      %p146 = por %p144, %p145
      %p147 = scmp.ne.s32.totalorder %s136, %s139
      %p148 = scmp.eq.s32.totalorder %s26, 1
      %p149 = por %p147, %p148
      %p150 = scmp.ne.s32.totalorder %s139, %s140
      %p151 = scmp.eq.s32.totalorder %s26, 0
      %p152 = por %p150, %p151
      %p153 = scmp.ne.s32.totalorder %s139, %s140
      %p154 = scmp.eq.s32.totalorder %s27, 1
      %p155 = por %p153, %p154
      %p157 = scmp.ne.s32.totalorder %s140, %s156
      %p158 = scmp.eq.s32.totalorder %s27, 0
      %p159 = por %p157, %p158
      %s160 = ssub.s32 %s28, %s47
      %s161 = ssub.s32 %s29, %s43
      %s162 = sor.u32 %s160, %s161
      %p163 = scmp.eq.s32.totalorder %s162, 0
      %s165 = sadd.s32 %s164, 1
      %s166 = scalar_select %p163, %s164, %s165
      %p169 = pneg %p163
      %p170 = scmp.eq.s32.totalorder %s21, 1
      %p171 = por %p169, %p170
      %p172 = scmp.ne.s32.totalorder %s164, %s167
      %p173 = scmp.eq.s32.totalorder %s21, 0
      %p174 = por %p172, %p173
      %p175 = scmp.ne.s32.totalorder %s164, %s167
      %p176 = scmp.eq.s32.totalorder %s26, 1
      %p177 = por %p175, %p176
      %p178 = scmp.ne.s32.totalorder %s167, %s168
      %p179 = scmp.eq.s32.totalorder %s26, 0
      %p180 = por %p178, %p179
      %p181 = scmp.ne.s32.totalorder %s167, %s168
      %p182 = scmp.eq.s32.totalorder %s27, 1
      %p183 = por %p181, %p182
      %p185 = scmp.ne.s32.totalorder %s168, %s184
      %p186 = scmp.eq.s32.totalorder %s27, 0
      %p187 = por %p185, %p186
      %s188 = ssub.s32 %s28, %s47
      %s189 = ssub.s32 %s29, %s43
      %s190 = sor.u32 %s188, %s189
      %p191 = scmp.eq.s32.totalorder %s190, 0
      %s193 = sadd.s32 %s192, 1
      %s194 = scalar_select %p191, %s192, %s193
      %p197 = pneg %p191
      %p198 = scmp.eq.s32.totalorder %s21, 1
      %p199 = por %p197, %p198
      %p200 = scmp.ne.s32.totalorder %s192, %s195
      %p201 = scmp.eq.s32.totalorder %s21, 0
      %p202 = por %p200, %p201
      %p203 = scmp.ne.s32.totalorder %s192, %s195
      %p204 = scmp.eq.s32.totalorder %s26, 1
      %p205 = por %p203, %p204
      %p206 = scmp.ne.s32.totalorder %s195, %s196
      %p207 = scmp.eq.s32.totalorder %s26, 0
      %p208 = por %p206, %p207
      %p209 = scmp.ne.s32.totalorder %s195, %s196
      %p210 = scmp.eq.s32.totalorder %s27, 1
      %p211 = por %p209, %p210
      %p213 = scmp.ne.s32.totalorder %s196, %s212
      %p214 = scmp.eq.s32.totalorder %s27, 0
      %p215 = por %p213, %p214
      %p216 = scmp.le.s32.totalorder 1, %s21
      %p217 = scmp.lt.s32.totalorder %s21, 3
      %p218 = pnand %p216, %p217
      %p219 = pneg %p218
      // Predicated region
      $region9: #{tpu_custom_call.1} parent=5 // pred_check
        _
      $region10: #{tpu_custom_call.1} parent=5 // pred_check_branch
        %221 = sbr.rel (%p218) target = $region12
      $region11: #{tpu_custom_call.1} parent=5 // pred_region
        %s222 = ssub.s32 %s21, 1
      $region12: #{tpu_custom_call.1} parent=5 // pred_fallthru
        _
      %p223 = scmp.lt.s32.totalorder %s21, 2
      // Predicated region
      $region13: #{tpu_custom_call.1} parent=5 // pred_check
        %p224 = pneg %p223
      $region14: #{tpu_custom_call.1} parent=5 // pred_check_branch
        %226 = sbr.rel (%p224) target = $region16
      $region15: #{tpu_custom_call.1} parent=5 // pred_region
        // Predicated region
        $region17: #{tpu_custom_call.1} parent=15 // pred_check
          %p227 = pneg %p62
        $region18: #{tpu_custom_call.1} parent=15 // pred_check_branch
          %229 = sbr.rel (%p227) target = $region20
        $region19: #{tpu_custom_call.1} parent=15 // pred_region
          %s230 = sand.u32 %s52, 1
          %s231 = scalar_lea.sflag [#allocation7], %s230
          %s232 = sand.u32 %s52, 1
          %s233 = smul.addr %s232, 8
          %s234 = scalar_lea.vmem [#allocation6], %s233
          %s235 = smul.u32 2, %s29
          %s237 = ssub.s32 128, 128
          %238 = vsyncadd %s231, %s237
          %s239 = smul.addr %s28, 2
          %s240 = sadd.s32 %s235, %s239
          %s241 = smul.addr %s240, 64
          %s242 = scalar_lea.hbm %s0, %s241
          %s243 = sshll.u32 %s234, 4
          %s244 = int_to_ptr.vmem [resolvable:$true] %s243
          %249 = dma.hbm_to_vmem [thread:$0]  %s242, 128, %s244, %s231, 64, 64, 4
        $region20: #{tpu_custom_call.1} parent=15 // pred_fallthru
          _
        // Predicated region
        $region21: #{tpu_custom_call.1} parent=15 // pred_check
          %p250 = pneg %p90
        $region22: #{tpu_custom_call.1} parent=15 // pred_check_branch
          %252 = sbr.rel (%p250) target = $region24
        $region23: #{tpu_custom_call.1} parent=15 // pred_region
          %s253 = sand.u32 %s21, 1
          %s254 = scalar_lea.sflag [#allocation10], %s253
          %s255 = sand.u32 %s80, 1
          %s256 = smul.addr %s255, 8
          %s257 = scalar_lea.vmem [#allocation9], %s256
          %s258 = smul.u32 2, %s30
          %s260 = ssub.s32 128, 128
          %261 = vsyncadd %s254, %s260
          %s262 = smul.addr %s28, 2
          %s263 = sadd.s32 %s258, %s262
          %s264 = smul.addr %s263, 64
          %s265 = scalar_lea.hbm %s1, %s264
          %s266 = sshll.u32 %s257, 4
          %s267 = int_to_ptr.vmem [resolvable:$true] %s266
          %272 = dma.hbm_to_vmem [thread:$0]  %s265, 128, %s267, %s254, 64, 64, 4
        $region24: #{tpu_custom_call.1} parent=15 // pred_fallthru
          _
        // Predicated region
        $region25: #{tpu_custom_call.1} parent=15 // pred_check
          %p273 = pneg %p118
        $region26: #{tpu_custom_call.1} parent=15 // pred_check_branch
          %275 = sbr.rel (%p273) target = $region28
        $region27: #{tpu_custom_call.1} parent=15 // pred_region
          %s276 = sand.u32 %s21, 1
          %s277 = scalar_lea.sflag [#allocation10], %s276
          %s278 = sand.u32 %s108, 1
          %s279 = smul.addr %s278, 8
          %s280 = scalar_lea.vmem [#allocation11], %s279
          %s281 = smul.u32 2, %s30
          %s283 = ssub.s32 128, 128
          %284 = vsyncadd %s277, %s283
          %s285 = smul.addr %s28, 2
          %s286 = sadd.s32 %s281, %s285
          %s287 = smul.addr %s286, 64
          %s288 = scalar_lea.hbm %s2, %s287
          %s289 = sshll.u32 %s280, 4
          %s290 = int_to_ptr.vmem [resolvable:$true] %s289
          %295 = dma.hbm_to_vmem [thread:$0]  %s288, 128, %s290, %s277, 64, 64, 4
        $region28: #{tpu_custom_call.1} parent=15 // pred_fallthru
          _
      $region16: #{tpu_custom_call.1} parent=5 // pred_fallthru
        _
      %p296 = scmp.le.s32.totalorder 1, %s21
      %p297 = scmp.lt.s32.totalorder %s21, 3
      %p298 = pnand %p296, %p297
      %p299 = pneg %p298
      // Predicated region
      $region29: #{tpu_custom_call.1} parent=5 // pred_check
        _
      $region30: #{tpu_custom_call.1} parent=5 // pred_check_branch
        %301 = sbr.rel (%p298) target = $region32
      $region31: #{tpu_custom_call.1} parent=5 // pred_region
        %s302 = ssub.s32 %s21, 1
        %s303 = sand.u32 %s55, 1
        %s304 = scalar_lea.sflag [#allocation7], %s303
        %s305 = sand.u32 %s55, 1
        %s306 = smul.addr %s305, 8
        %s307 = scalar_lea.vmem [#allocation6], %s306
        // Predicated region
        $region33: #{tpu_custom_call.1} parent=31 // pred_check
          %p308 = pneg %p68
        $region34: #{tpu_custom_call.1} parent=31 // pred_check_branch
          %310 = sbr.rel (%p308) target = $region36
        $region35: #{tpu_custom_call.1} parent=31 // pred_region
          %311 = dma.done %s304, 128
        $region36: #{tpu_custom_call.1} parent=31 // pred_fallthru
          _
        %s312 = sand.u32 %s26, 1
        %s313 = scalar_lea.sflag [#allocation10], %s312
        %s314 = sand.u32 %s83, 1
        %s315 = smul.addr %s314, 8
        %s316 = scalar_lea.vmem [#allocation9], %s315
        // Predicated region
        $region37: #{tpu_custom_call.1} parent=31 // pred_check
          %p317 = pneg %p96
        $region38: #{tpu_custom_call.1} parent=31 // pred_check_branch
          %319 = sbr.rel (%p317) target = $region40
        $region39: #{tpu_custom_call.1} parent=31 // pred_region
          %320 = dma.done %s313, 128
        $region40: #{tpu_custom_call.1} parent=31 // pred_fallthru
          _
        %s321 = sand.u32 %s26, 1
        %s322 = scalar_lea.sflag [#allocation10], %s321
        %s323 = sand.u32 %s111, 1
        %s324 = smul.addr %s323, 8
        %s325 = scalar_lea.vmem [#allocation11], %s324
        // Predicated region
        $region41: #{tpu_custom_call.1} parent=31 // pred_check
          %p326 = pneg %p124
        $region42: #{tpu_custom_call.1} parent=31 // pred_check_branch
          %328 = sbr.rel (%p326) target = $region44
        $region43: #{tpu_custom_call.1} parent=31 // pred_region
          %329 = dma.done %s322, 128
        $region44: #{tpu_custom_call.1} parent=31 // pred_fallthru
          _
        %s330 = sand.u32 %s55, 1
        %s331 = scalar_lea.sflag [#allocation7], %s330
        %s332 = sand.u32 %s55, 1
        %s333 = smul.addr %s332, 8
        %s334 = scalar_lea.vmem [#allocation6], %s333
        %p335 = pneg %p68
        %p336 = pneg %p65
        %s337 = sand.u32 %s26, 1
        %s338 = scalar_lea.sflag [#allocation10], %s337
        %s339 = sand.u32 %s83, 1
        %s340 = smul.addr %s339, 8
        %s341 = scalar_lea.vmem [#allocation9], %s340
        %p342 = pneg %p96
        %p343 = pneg %p93
        %s344 = sand.u32 %s26, 1
        %s345 = scalar_lea.sflag [#allocation10], %s344
        %s346 = sand.u32 %s111, 1
        %s347 = smul.addr %s346, 8
        %s348 = scalar_lea.vmem [#allocation11], %s347
        %p349 = pneg %p124
        %p350 = pneg %p121
        %p351 = pneg %p152
        %p352 = pneg %p149
        %s353 = sand.u32 %s139, 1
        %s354 = scalar_lea.sflag [#allocation8], %s353
        %s355 = sand.u32 %s139, 1
        %s356 = smul.addr %s355, 16
        %s357 = scalar_lea.vmem [#allocation12], %s356
        %p358 = pneg %p180
        %p359 = pneg %p177
        %s360 = smul.u32 2, %s32
        %p361 = scmp.lt.s32.totalorder %s31, 1
        %s362 = scalar_select %p361, %s31, 1
        %p363 = scmp.lt.s32.totalorder %s360, 1
        %s364 = scalar_select %p363, %s360, 1
        %s365 = smul.addr %s362, 2
        %s366 = sadd.s32 %s364, %s365
        %s367 = smul.addr %s366, 8
        %s368 = scalar_lea.vmem %s4, %s367
        %p369 = pneg %p208
        %p370 = pneg %p205
        %s371 = smul.u32 2, %s32
        %p372 = scmp.lt.s32.totalorder %s31, 1
        %s373 = scalar_select %p372, %s31, 1
        %p374 = scmp.lt.s32.totalorder %s371, 1
        %s375 = scalar_select %p374, %s371, 1
        %s376 = smul.addr %s373, 2
        %s377 = sadd.s32 %s375, %s376
        %s378 = smul.addr %s377, 8
        %s379 = scalar_lea.vmem %s5, %s378
        %s380 = smul.u32 2, %s32
        %s381 = smul.u32 2, %s33
        %s382 = smul.u32 2, %s33
        %s383 = smul.u32 2, %s32
        %s384 = smul.u32 2, %s32
        %p385 = scmp.lt.s32.totalorder %s31, 1
        %s386 = scalar_select %p385, %s31, 1
        %p387 = scmp.lt.s32.totalorder %s384, 1
        %s388 = scalar_select %p387, %s384, 1
        %s389 = smul.addr %s386, 2
        %s390 = sadd.s32 %s388, %s389
        %s391 = smul.addr %s390, 8
        %s392 = scalar_lea.vmem %s4, %s391
        %s393 = smul.u32 2, %s32
        %s394 = smul.u32 2, %s32
        %p395 = scmp.lt.s32.totalorder %s31, 1
        %s396 = scalar_select %p395, %s31, 1
        %p397 = scmp.lt.s32.totalorder %s394, 1
        %s398 = scalar_select %p397, %s394, 1
        %s399 = smul.addr %s396, 2
        %s400 = sadd.s32 %s398, %s399
        %s401 = smul.addr %s400, 8
        %s402 = scalar_lea.vmem %s5, %s401
        %s403 = smul.u32 2, %s32
        %p405 = scmp.eq.s32.totalorder %s33, 0
        // Predicated region
        $region45: #{tpu_custom_call.1} parent=31 // pred_check
          %p406 = pneg %p405
        $region46: #{tpu_custom_call.1} parent=31 // pred_check_branch
          %408 = sbr.rel (%p406) target = $region48
        $region47: #{tpu_custom_call.1} parent=31 // pred_region
          %v409 = vld [vmem:[%s307] sm:$0xf]
          %v410 = vld [vmem:[%s307 + $0x4] sm:$0xf]
          %v411 = vunpack.c.l.bf16 %v409
          %v412 = vunpack.c.l.bf16 %v410
          %v413 = vmul.f32 %v411, 0.17677669
          %v414 = vmul.f32 %v412, 0.17677669
          %v415 = vpack.c.bf16 %v414, %v413
          %vm416 = vcmask 261120
          %417 = vst.msk [vmem:[#allocation2] sm:$0xff] %vm416, %v415
          %vm418 = vcmask 7168
          %419 = vst.msk [vmem:[#allocation3] sm:$0xff] %vm418, -inf
          %420 = vst.msk [vmem:[#allocation3 + $0x8] sm:$0xff] %vm418, -inf
          %421 = vst.msk [vmem:[#allocation4] sm:$0xff] %vm418, 0.0
          %422 = vst.msk [vmem:[#allocation4 + $0x8] sm:$0xff] %vm418, 0.0
          %423 = vst.msk [vmem:[#allocation5] sm:$0xff] %vm416, 0.0
          %424 = vst.msk [vmem:[#allocation5 + $0x8] sm:$0xff] %vm416, 0.0
        $region48: #{tpu_custom_call.1} parent=31 // pred_fallthru
          _
        %v425 = vld [vmem:[#allocation2] sm:$0xff]
        %v426 = vld [vmem:[%s316] sm:$0xf]
        %v427 = vld [vmem:[%s316 + $0x4] sm:$0xf]
        %v428 = vld [vmem:[%s325] sm:$0xf]
        %v429 = vld [vmem:[%s325 + $0x4] sm:$0xf]
        %v432 = vunpack.c.l.b16 %v426
        %v433 = vunpack.c.l.b16 %v427
        %v434 = vpack.c.b16 %v433, %v432
        %vm435 = vcmask 261120
        %v437 = vsel %vm435, %v425, 0
        %v440 = vsel %vm435, %v434, 0
        %442 = vmatprep.subr.bf16.mxu0 0
        %443 = vmatpush1.bf16.xpose.msra.mxu0 %v440
        %444 = vmatprep.subr.bf16.mxu0 0
        %445 = vmatpush1.bf16.xpose.msra.mxu0 0
        %446 = vmatprep.subr.bf16.mxu0 0
        %447 = vmatpush1.bf16.xpose.msra.mxu0 0
        %448 = vmatprep.subr.bf16.mxu0 0
        %449 = vmatpush1.bf16.xpose.msra.mxu0 0
        %450 = vmatprep.subr.bf16.mxu0 0
        %451 = vmatpush1.bf16.xpose.msra.mxu0 0
        %452 = vmatprep.subr.bf16.mxu0 0
        %453 = vmatpush1.bf16.xpose.msra.mxu0 0
        %454 = vmatprep.subr.bf16.mxu0 0
        %455 = vmatpush1.bf16.xpose.msra.mxu0 0
        %456 = vmatprep.subr.bf16.mxu0 0
        %457 = vmatpush1.bf16.xpose.msra.mxu0 0
        %458 = vmatprep.subr.bf16.mxu0 0
        %459 = vmatpush1.bf16.xpose.msra.mxu0 0
        %460 = vmatprep.subr.bf16.mxu0 0
        %461 = vmatpush1.bf16.xpose.msra.mxu0 0
        %462 = vmatprep.subr.bf16.mxu0 0
        %463 = vmatpush1.bf16.xpose.msra.mxu0 0
        %464 = vmatprep.subr.bf16.mxu0 0
        %465 = vmatpush1.bf16.xpose.msra.mxu0 0
        %466 = vmatprep.subr.bf16.mxu0 0
        %467 = vmatpush1.bf16.xpose.msra.mxu0 0
        %468 = vmatprep.subr.bf16.mxu0 0
        %469 = vmatpush1.bf16.xpose.msra.mxu0 0
        %470 = vmatprep.subr.bf16.mxu0 0
        %471 = vmatpush1.bf16.xpose.msra.mxu0 0
        %472 = vmatprep.subr.bf16.mxu0 0
        %473 = vmatpush1.bf16.xpose.msra.mxu0 0
        %474 = vmatprep.mubr.bf16.mxu0 0
        %475 = vmatmul.mubr.bf16.gmra.mrb[0].mxu0 %v437
        %v476 = vpop.f32.mrb[0].mxu0
        %v477 = vadd.f32 0.0, %v476
        %v478 = vpop.f32.mrb[0].mxu0
        %v479 = vpop.f32.mrb[0].mxu0
        %v480 = vadd.f32 0.0, %v479
        %v481 = vpop.f32.mrb[0].mxu0
        %482 = vdwg.mxu0
        %s483 = smul.u32 %s33, 16
        %v484 = vlaneseq
        %v485 = vand.u32 %v484, 127
        %v486 = vstv %s483
        %v487 = vadd.s32 %v486, %v485
        %vm488 = vcmp.lt.s32.totalorder %v487, 8
        %v489 = vsel %vm488, %v477, -inf
        %v490 = vsel %vm488, %v480, -inf
        %v491 = vld [vmem:[#allocation3] sm:$0xff]
        %v492 = vld [vmem:[#allocation3 + $0x8] sm:$0xff]
        %vm493 = vcmask 130048
        %v494 = vsel %vm493, %v489, -inf
        %495 = vmax.xlane.f32.xlu0 %v494
        %v496 = vpop.xlane.xlu0 %495
        %v497 = vsel %vm493, %v490, -inf
        %498 = vmax.xlane.f32.xlu0 %v497
        %v499 = vpop.xlane.xlu0 %498
        %v500 = vmax.f32 %v491, %v496
        %v501 = vmax.f32 %v492, %v499
        %v502 = vsub.f32 %v491, %v500
        %v503 = vsub.f32 %v492, %v501
        %v504 = vmul.f32 %v502, 1.442695
        %v505 = vpow.pop %v504
        %v506 = vmul.f32 %v503, 1.442695
        %v507 = vpow.pop %v506
        %509 = vset.pattern.permute.xlu0 0
        %510 = vperm.xlu0 %509, %v500
        %v511 = vpop.permute.xlu0 %510
        %514 = vset.pattern.permute.xlu0 0
        %515 = vperm.xlu0 %514, %v501
        %v516 = vpop.permute.xlu0 %515
        %v518 = vsub.f32 %v489, %v511
        %v519 = vsub.f32 %v490, %v516
        %v520 = vmul.f32 %v518, 1.442695
        %v521 = vpow.pop %v520
        %v522 = vmul.f32 %v519, 1.442695
        %v523 = vpow.pop %v522
        %v524 = vld [vmem:[#allocation4] sm:$0xff]
        %v525 = vld [vmem:[#allocation4 + $0x8] sm:$0xff]
        %v526 = vmul.f32 %v505, %v524
        %v527 = vmul.f32 %v507, %v525
        %v528 = vsel %vm493, %v521, 0.0
        %529 = vadd.xlane.f32.xlu0 %v528
        %v530 = vpop.xlane.xlu0 %529
        %v531 = vsel %vm493, %v523, 0.0
        %532 = vadd.xlane.f32.xlu0 %v531
        %v533 = vpop.xlane.xlu0 %532
        %v534 = vadd.f32 %v526, %v530
        %v535 = vadd.f32 %v527, %v533
        %vm536 = vcmask 7168
        %537 = vst.msk [vmem:[#allocation4] sm:$0xff] %vm536, %v534
        %538 = vst.msk [vmem:[#allocation4 + $0x8] sm:$0xff] %vm536, %v535
        %v539 = vld [vmem:[#allocation5] sm:$0xff]
        %v540 = vld [vmem:[#allocation5 + $0x8] sm:$0xff]
        %542 = vset.pattern.permute.xlu0 0
        %543 = vperm.xlu0 %542, %v505
        %v544 = vpop.permute.xlu0 %543
        %547 = vset.pattern.permute.xlu0 0
        %548 = vperm.xlu0 %547, %v507
        %v549 = vpop.permute.xlu0 %548
        %v551 = vmul.f32 %v544, %v539
        %v552 = vmul.f32 %v549, %v540
        %v553 = vpack.c.bf16 %v523, %v521
        %v556 = vunpack.c.l.b16 %v428
        %v557 = vunpack.c.l.b16 %v429
        %v558 = vpack.c.b16 %v557, %v556
        %v561 = vsel %vm493, %v553, 0
        %563 = vmatprep.subr.bf16.mxu0 0
        %564 = vmatpush1.bf16.msra.mxu0 %v558
        %565 = vmatprep.subr.bf16.mxu0 0
        %566 = vmatpush1.bf16.msra.mxu0 0
        %567 = vmatprep.subr.bf16.mxu0 0
        %568 = vmatpush1.bf16.msra.mxu0 0
        %569 = vmatprep.subr.bf16.mxu0 0
        %570 = vmatpush1.bf16.msra.mxu0 0
        %571 = vmatprep.subr.bf16.mxu0 0
        %572 = vmatpush1.bf16.msra.mxu0 0
        %573 = vmatprep.subr.bf16.mxu0 0
        %574 = vmatpush1.bf16.msra.mxu0 0
        %575 = vmatprep.subr.bf16.mxu0 0
        %576 = vmatpush1.bf16.msra.mxu0 0
        %577 = vmatprep.subr.bf16.mxu0 0
        %578 = vmatpush1.bf16.msra.mxu0 0
        %579 = vmatprep.subr.bf16.mxu0 0
        %580 = vmatpush1.bf16.msra.mxu0 0
        %581 = vmatprep.subr.bf16.mxu0 0
        %582 = vmatpush1.bf16.msra.mxu0 0
        %583 = vmatprep.subr.bf16.mxu0 0
        %584 = vmatpush1.bf16.msra.mxu0 0
        %585 = vmatprep.subr.bf16.mxu0 0
        %586 = vmatpush1.bf16.msra.mxu0 0
        %587 = vmatprep.subr.bf16.mxu0 0
        %588 = vmatpush1.bf16.msra.mxu0 0
        %589 = vmatprep.subr.bf16.mxu0 0
        %590 = vmatpush1.bf16.msra.mxu0 0
        %591 = vmatprep.subr.bf16.mxu0 0
        %592 = vmatpush1.bf16.msra.mxu0 0
        %593 = vmatprep.subr.bf16.mxu0 0
        %594 = vmatpush1.bf16.msra.mxu0 0
        %595 = vmatprep.mubr.bf16.mxu0 0
        %596 = vmatmul.mubr.bf16.gmra.mrb[0].mxu0 %v561
        %v597 = vpop.f32.mrb[0].mxu0
        %v598 = vadd.f32 0.0, %v597
        %v599 = vpop.f32.mrb[0].mxu0
        %v600 = vpop.f32.mrb[0].mxu0
        %v601 = vadd.f32 0.0, %v600
        %v602 = vpop.f32.mrb[0].mxu0
        %603 = vdwg.mxu0
        %v604 = vadd.f32 %v551, %v598
        %v605 = vadd.f32 %v552, %v601
        %606 = vst.msk [vmem:[#allocation5] sm:$0xff] %vm435, %v604
        %607 = vst.msk [vmem:[#allocation5 + $0x8] sm:$0xff] %vm435, %v605
        %608 = vst.msk [vmem:[#allocation3] sm:$0xff] %vm536, %v500
        %609 = vst.msk [vmem:[#allocation3 + $0x8] sm:$0xff] %vm536, %v501
        // Predicated region
        $region49: #{tpu_custom_call.1} parent=31 // pred_check
          %p610 = pneg %p405
        $region50: #{tpu_custom_call.1} parent=31 // pred_check_branch
          %612 = sbr.rel (%p610) target = $region52
        $region51: #{tpu_custom_call.1} parent=31 // pred_region
          %v613 = vld [vmem:[#allocation4] sm:$0xff]
          %v614 = vld [vmem:[#allocation4 + $0x8] sm:$0xff]
          %v615 = vrcp.pop %v613
          %v616 = vrcp.pop %v614
          %v617 = vld [vmem:[#allocation5] sm:$0xff]
          %v618 = vld [vmem:[#allocation5 + $0x8] sm:$0xff]
          %620 = vset.pattern.permute.xlu0 0
          %621 = vperm.xlu0 %620, %v615
          %v622 = vpop.permute.xlu0 %621
          %625 = vset.pattern.permute.xlu0 0
          %626 = vperm.xlu0 %625, %v616
          %v627 = vpop.permute.xlu0 %626
          %v629 = vmul.f32 %v617, %v622
          %v630 = vmul.f32 %v618, %v627
          %631 = vst.msk [vmem:[%s357] sm:$0xff] %vm435, %v629
          %632 = vst.msk [vmem:[%s357 + $0x8] sm:$0xff] %vm435, %v630
          %v633 = vld [vmem:[#allocation3] sm:$0xff]
          %v634 = vld [vmem:[#allocation3 + $0x8] sm:$0xff]
          %635 = vst.msk [vmem:[%s392] sm:$0xff] %vm536, %v633
          %636 = vst.msk [vmem:[%s392 + $0x8] sm:$0xff] %vm536, %v634
          %v637 = vld [vmem:[#allocation4] sm:$0xff]
          %v638 = vld [vmem:[#allocation4 + $0x8] sm:$0xff]
          %639 = vst.msk [vmem:[%s402] sm:$0xff] %vm536, %v637
          %640 = vst.msk [vmem:[%s402 + $0x8] sm:$0xff] %vm536, %v638
        $region52: #{tpu_custom_call.1} parent=31 // pred_fallthru
          _
        %s641 = sand.u32 %s139, 1
        %s642 = scalar_lea.sflag [#allocation8], %s641
        %s643 = sand.u32 %s139, 1
        %s644 = smul.addr %s643, 16
        %s645 = scalar_lea.vmem [#allocation12], %s644
        %s646 = smul.u32 2, %s32
        %p647 = scmp.lt.s32.totalorder %s31, 1
        %s648 = scalar_select %p647, %s31, 1
        %p649 = scmp.lt.s32.totalorder %s646, 1
        %s650 = scalar_select %p649, %s646, 1
        %s651 = smul.addr %s648, 2
        %s652 = sadd.s32 %s650, %s651
        %s653 = smul.addr %s652, 8
        %s654 = scalar_lea.vmem %s4, %s653
        %s655 = smul.u32 2, %s32
        %p656 = scmp.lt.s32.totalorder %s31, 1
        %s657 = scalar_select %p656, %s31, 1
        %p658 = scmp.lt.s32.totalorder %s655, 1
        %s659 = scalar_select %p658, %s655, 1
        %s660 = smul.addr %s657, 2
        %s661 = sadd.s32 %s659, %s660
        %s662 = smul.addr %s661, 8
        %s663 = scalar_lea.vmem %s5, %s662
        // Predicated region
        $region53: #{tpu_custom_call.1} parent=31 // pred_check
          %p664 = pneg %p149
        $region54: #{tpu_custom_call.1} parent=31 // pred_check_branch
          %666 = sbr.rel (%p664) target = $region56
        $region55: #{tpu_custom_call.1} parent=31 // pred_region
          %s667 = smul.u32 2, %s32
          %s669 = ssub.s32 256, 256
          %670 = vsyncadd %s642, %s669
          %s671 = smul.addr %s31, 2
          %s672 = sadd.s32 %s667, %s671
          %s673 = smul.addr %s672, 128
          %s674 = scalar_lea.hbm %s3, %s673
          %s675 = sshll.u32 %s645, 4
          %s676 = int_to_ptr.vmem [resolvable:$true] %s675
          %681 = dma.vmem_to_hbm [thread:$0]  %s676, 256, %s674, %s642, 128, 128, 8
        $region56: #{tpu_custom_call.1} parent=31 // pred_fallthru
          _
        // Predicated region
        $region57: #{tpu_custom_call.1} parent=31 // pred_check
          %p682 = pneg %p177
        $region58: #{tpu_custom_call.1} parent=31 // pred_check_branch
          %684 = sbr.rel (%p682) target = $region60
        $region59: #{tpu_custom_call.1} parent=31 // pred_region
          %s685 = smul.u32 2, %s32
        $region60: #{tpu_custom_call.1} parent=31 // pred_fallthru
          _
        // Predicated region
        $region61: #{tpu_custom_call.1} parent=31 // pred_check
          %p686 = pneg %p205
        $region62: #{tpu_custom_call.1} parent=31 // pred_check_branch
          %688 = sbr.rel (%p686) target = $region64
        $region63: #{tpu_custom_call.1} parent=31 // pred_region
          %s689 = smul.u32 2, %s32
        $region64: #{tpu_custom_call.1} parent=31 // pred_fallthru
          _
      $region32: #{tpu_custom_call.1} parent=5 // pred_fallthru
        _
      %p690 = scmp.le.s32.totalorder 2, %s21
      // Predicated region
      $region65: #{tpu_custom_call.1} parent=5 // pred_check
        %p691 = pneg %p690
      $region66: #{tpu_custom_call.1} parent=5 // pred_check_branch
        %693 = sbr.rel (%p691) target = $region68
      $region67: #{tpu_custom_call.1} parent=5 // pred_region
        %s694 = ssub.s32 %s21, 2
        // Predicated region
        $region69: #{tpu_custom_call.1} parent=67 // pred_check
          %p695 = pneg %p155
        $region70: #{tpu_custom_call.1} parent=67 // pred_check_branch
          %697 = sbr.rel (%p695) target = $region72
        $region71: #{tpu_custom_call.1} parent=67 // pred_region
          %s698 = sand.u32 %s140, 1
          %s699 = scalar_lea.sflag [#allocation8], %s698
          %s700 = sand.u32 %s140, 1
          %s701 = smul.addr %s700, 16
          %s702 = scalar_lea.vmem [#allocation12], %s701
          %703 = dma.done %s699, 256
        $region72: #{tpu_custom_call.1} parent=67 // pred_fallthru
          _
        // Predicated region
        $region73: #{tpu_custom_call.1} parent=67 // pred_check
          %p704 = pneg %p183
        $region74: #{tpu_custom_call.1} parent=67 // pred_check_branch
          %706 = sbr.rel (%p704) target = $region76
        $region75: #{tpu_custom_call.1} parent=67 // pred_region
          %s707 = smul.u32 2, %s35
          %p708 = scmp.lt.s32.totalorder %s34, 1
          %s709 = scalar_select %p708, %s34, 1
          %p710 = scmp.lt.s32.totalorder %s707, 1
          %s711 = scalar_select %p710, %s707, 1
          %s712 = smul.addr %s709, 2
          %s713 = sadd.s32 %s711, %s712
          %s714 = smul.addr %s713, 8
          %s715 = scalar_lea.vmem %s4, %s714
        $region76: #{tpu_custom_call.1} parent=67 // pred_fallthru
          _
        // Predicated region
        $region77: #{tpu_custom_call.1} parent=67 // pred_check
          %p716 = pneg %p211
        $region78: #{tpu_custom_call.1} parent=67 // pred_check_branch
          %718 = sbr.rel (%p716) target = $region80
        $region79: #{tpu_custom_call.1} parent=67 // pred_region
          %s719 = smul.u32 2, %s35
          %p720 = scmp.lt.s32.totalorder %s34, 1
          %s721 = scalar_select %p720, %s34, 1
          %p722 = scmp.lt.s32.totalorder %s719, 1
          %s723 = scalar_select %p722, %s719, 1
          %s724 = smul.addr %s721, 2
          %s725 = sadd.s32 %s723, %s724
          %s726 = smul.addr %s725, 8
          %s727 = scalar_lea.vmem %s5, %s726
        $region80: #{tpu_custom_call.1} parent=67 // pred_fallthru
          _
      $region68: #{tpu_custom_call.1} parent=5 // pred_fallthru
        _
    $region6: #{tpu_custom_call.1} parent=1 // loop_footer
      %s25 = sadd.s32 1, %s21
    $region7: #{tpu_custom_call.1} parent=1 // loop_footer_branch
      %20 = sbr.rel target = $region3
    $region8: #{tpu_custom_call.1} parent=1 // loop_exit
      _
    %728 = vsyncpa [#allocation7], 1
    %s729 = scalar_lea.sflag [#allocation7], 1
    %730 = vsyncpa %s729, 1
    %731 = vsyncpa [#allocation10], 1
    %s732 = scalar_lea.sflag [#allocation10], 1
    %733 = vsyncpa %s732, 1
    %734 = vsyncpa [#allocation8], 1
    %s735 = scalar_lea.sflag [#allocation8], 1
    %736 = vsyncpa %s735, 1

</llo_original>
